<compile_context>
chip_gen: v7x
topology: tpu7x:2x2x1
jax: 0.10.0
libtpu: 0.0.40
codegen_flags: <defaults>
</compile_context>

<pallas_src>
import jax
import jax.numpy as jnp
from jax.experimental import pallas as pl
from jax.experimental.pallas import tpu as pltpu


# ----------------------------------------------------------------------
# Pallas kernel: streaming sum / sum-of-squares  ->  (feature-norm folded
# through mean-pool) -> projection matmul -> L2-normalize, for 2 utterances.
# ----------------------------------------------------------------------
def sim_embed_kernel(wav1_ref, wav2_ref, w_hbm,           # inputs
                     emb_ref,                              # output (2, E)
                     sum1_ref, sumsq1_ref,                 # scratch (8, F)
                     sum2_ref, sumsq2_ref,                 # scratch (8, F)
                     w_vmem):                              # scratch (F, E)
    t = pl.program_id(0)

    @pl.when(t == 0)
    def _init():
        sum1_ref[...] = jnp.zeros_like(sum1_ref)
        sumsq1_ref[...] = jnp.zeros_like(sumsq1_ref)
        sum2_ref[...] = jnp.zeros_like(sum2_ref)
        sumsq2_ref[...] = jnp.zeros_like(sumsq2_ref)

    t_tile, f = wav1_ref.shape
    n_sub = t_tile // 8

    # Steady state: per-sublane partial sums only (aligned vreg adds, no XLU
    # cross-sublane reduction, no masked (1, F) stores).  This is hidden under
    # the waveform DMA, which is the real bottleneck.
    x1 = wav1_ref[...].reshape(n_sub, 8, f)                # (n_sub, 8, F)
    sum1_ref[...] += jnp.sum(x1, axis=0)                   # (8, F)
    sumsq1_ref[...] += jnp.sum(x1 * x1, axis=0)            # (8, F)

    x2 = wav2_ref[...].reshape(n_sub, 8, f)
    sum2_ref[...] += jnp.sum(x2, axis=0)
    sumsq2_ref[...] += jnp.sum(x2 * x2, axis=0)

    @pl.when(t == pl.num_programs(0) - 1)
    def _finalize():
        n_frames = pl.num_programs(0) * t_tile             # total T
        inv_t = 1.0 / n_frames
        inv_n = inv_t / f                                  # 1 / (T * F)

        # Loop-invariant projection weight: fetched exactly once, here.
        pltpu.sync_copy(w_hbm, w_vmem)

        def pooled_row(s8, q8):
            # Collapse the 8 sublane partials (runs once).
            s = jnp.sum(s8, axis=0, keepdims=True)         # (1, F)
            q = jnp.sum(q8, axis=0, keepdims=True)         # (1, F)
            # Wav2Vec2FeatureExtractor per-utterance zero-mean/unit-variance,
            # folded through the linear mean-pool (exact since the head is
            # linear).  Note: E[x^2]-E[x]^2 in f32 can cancel for long DC-heavy
            # audio; clamp guards negativity.
            mu = jnp.sum(s) * inv_n                        # scalar
            var = jnp.maximum(jnp.sum(q) * inv_n - mu * mu, 0.0)
            scale = jax.lax.rsqrt(var + 1e-7)
            return (s * inv_t - mu) * scale                # (1, F)

        pooled = jnp.concatenate(
            [pooled_row(sum1_ref[...], sumsq1_ref[...]),
             pooled_row(sum2_ref[...], sumsq2_ref[...])],
            axis=0)                                        # (2, F)

        # TODO(synk): pretrained WavLM transformer replaced by a deterministic
        # linear x-vector head (mean-pool over time + projection).
        emb = jnp.dot(pooled, w_vmem[...],
                      preferred_element_type=jnp.float32)  # (2, E)

        # torch.nn.functional.normalize(dim=-1, eps=1e-12)
        sq = jnp.sum(emb * emb, axis=-1, keepdims=True)    # (2, 1)
        emb_ref[...] = emb * jax.lax.rsqrt(jnp.maximum(sq, 1e-24))


# ----------------------------------------------------------------------
# Wrapper (framing, pallas_call, scalar cosine on the two embeddings)
# ----------------------------------------------------------------------
def sim_computer(wav_1, wav_2, w_proj, *, n_frames, frame_len, t_tile=8192):
    """Mirror of SimComputer.forward for two equal-rate, equal-length waveforms."""
    F = frame_len
    E = w_proj.shape[1]
    assert F % 128 == 0, "frame_len must be a multiple of the lane width"
    t_tile = min(t_tile, n_frames)
    assert n_frames % t_tile == 0, "n_frames must be divisible by t_tile"
    assert t_tile % 8 == 0, "(8,128) block constraint"

    # Free metadata reshapes of the contiguous 1-D waveforms (no HBM copy,
    # no jnp.stack): each becomes a (T, F) channels-last view.
    x1 = wav_1.reshape(n_frames, F).astype(jnp.float32)
    x2 = wav_2.reshape(n_frames, F).astype(jnp.float32)
    w_proj = w_proj.astype(jnp.float32)

    grid = (n_frames // t_tile,)                           # time tiles only

    emb = pl.pallas_call(
        sim_embed_kernel,
        out_shape=jax.ShapeDtypeStruct((2, E), jnp.float32),
        grid_spec=pltpu.PrefetchScalarGridSpec(
            num_scalar_prefetch=0,
            grid=grid,
            in_specs=[
                pl.BlockSpec((t_tile, F), lambda t: (t, 0)),       # wav 1 tile
                pl.BlockSpec((t_tile, F), lambda t: (t, 0)),       # wav 2 tile
                pl.BlockSpec(memory_space=pl.ANY),                 # weight: not pipelined
            ],
            out_specs=pl.BlockSpec((2, E), lambda t: (0, 0)),      # resident output
            scratch_shapes=[
                pltpu.VMEM((8, F), jnp.float32),   # sum_t x  (wav 1)
                pltpu.VMEM((8, F), jnp.float32),   # sum_t x^2 (wav 1)
                pltpu.VMEM((8, F), jnp.float32),   # sum_t x  (wav 2)
                pltpu.VMEM((8, F), jnp.float32),   # sum_t x^2 (wav 2)
                pltpu.VMEM((F, E), jnp.float32),   # projection weight (single copy)
            ],
        ),
        compiler_params=pltpu.CompilerParams(
            dimension_semantics=("arbitrary",),
            # 2 waveform inputs x 2 buffers x (t_tile*F*4B) must fit the scoped
            # budget even on v5e (16 MiB default) when t_tile is multi-MiB.
            vmem_limit_bytes=48 << 20,
        ),
    )(x1, x2, w_proj)                                      # (2, E), L2-normalized

    # torch.nn.CosineSimilarity(dim=-1, eps=1e-8) — tiny scalar epilogue in XLA.
    e0, e1 = emb[0], emb[1]
    num = jnp.sum(e0 * e1)
    den = jnp.maximum(
        jnp.sqrt(jnp.sum(e0 * e0)) * jnp.sqrt(jnp.sum(e1 * e1)), 1e-8)
    return num / den


# ----------------------------------------------------------------------
# Pure-JAX reference of the same synthetic forward (for a sanity check).
# ----------------------------------------------------------------------
def _ref_similarity(wav_1, wav_2, w_proj, n_frames, frame_len):
    def embed(w):
        x = w.reshape(n_frames, frame_len).astype(jnp.float32)
        mu = jnp.mean(x)
        var = jnp.mean((x - mu) ** 2)
        xn = (x - mu) / jnp.sqrt(var + 1e-7)
        pooled = jnp.mean(xn, axis=0)
        e = pooled @ w_proj
        return e / jnp.maximum(jnp.linalg.norm(e), 1e-12)
    e0 = embed(wav_1)
    e1 = embed(wav_2)
    den = jnp.maximum(jnp.linalg.norm(e0) * jnp.linalg.norm(e1), 1e-8)
    return jnp.dot(e0, e1) / den


if __name__ == "__main__":
    # Small, deterministic example shapes.
    T, F, E = 128, 128, 256          # frames, frame length (lanes), embedding dim
    L = T * F                        # waveform length = 16384 samples (~1 s @ 16 kHz)

    key = jax.random.PRNGKey(0)
    k1, k2, kw = jax.random.split(key, 3)
    wav_1 = jax.random.normal(k1, (L,), dtype=jnp.float32) * 0.1
    wav_2 = 0.7 * wav_1 + 0.3 * jax.random.normal(k2, (L,), dtype=jnp.float32) * 0.1

    # Deterministic synthetic projection weight (stands in for the pretrained
    # x-vector head).
    w_proj = (jax.random.normal(kw, (F, E), dtype=jnp.float32)
              / jnp.sqrt(jnp.float32(F)))

    sim = sim_computer(wav_1, wav_2, w_proj, n_frames=T, frame_len=F)
    sim = jax.block_until_ready(sim)
    similarity = float(sim)          # module returns a Python float

    ref = float(_ref_similarity(wav_1, wav_2, w_proj, T, F))
    assert -1.0 - 1e-5 <= similarity <= 1.0 + 1e-5
    assert abs(similarity - ref) < 2e-2, (similarity, ref)
    print("KERNEL_OK")
</pallas_src>

<mosaic_0001>
module attributes {stable_mosaic.version = 11 : i64} {
  func.func @sim_embed_kernel(%arg0: i32, %arg1: memref<128x128xf32, #tpu.memory_space<vmem>>, %arg2: memref<128x128xf32, #tpu.memory_space<vmem>>, %arg3: memref<128x256xf32, #tpu.memory_space<any>>, %arg4: memref<2x256xf32, #tpu.memory_space<vmem>>, %arg5: memref<8x128xf32, #tpu.memory_space<vmem>>, %arg6: memref<8x128xf32, #tpu.memory_space<vmem>>, %arg7: memref<8x128xf32, #tpu.memory_space<vmem>>, %arg8: memref<8x128xf32, #tpu.memory_space<vmem>>, %arg9: memref<128x256xf32, #tpu.memory_space<vmem>>) attributes {dimension_semantics = [#tpu.dimension_semantics<arbitrary>], iteration_bounds = array<i64: 1>, scalar_prefetch = 0 : i64, scratch_operands = 5 : i64, tpu.core_type = #tpu.core_type<tc>, window_params = [{transform_indices = @transform_0, window_bounds = array<i64: 128, 128>}, {transform_indices = @transform_1, window_bounds = array<i64: 128, 128>}, {}, {pipeline_mode = #tpu.pipeline_mode<synchronous>, transform_indices = @transform_3, window_bounds = array<i64: 2, 256>}]} {
    %c0_i32 = arith.constant 0 : i32
    %0 = arith.cmpi eq, %arg0, %c0_i32 : i32
    %1 = arith.extui %0 : i1 to i32
    %c0_i32_0 = arith.constant 0 : i32
    %2 = arith.cmpi ne, %1, %c0_i32_0 : i32
    scf.if %2 {
      %cst_25 = arith.constant 0.000000e+00 : f32
      %28 = vector.broadcast %cst_25 : f32 to vector<8x128xf32>
      %c0_26 = arith.constant 0 : index
      %c0_27 = arith.constant 0 : index
      %29 = vector.load %arg5[%c0_26, %c0_27] : memref<8x128xf32, #tpu.memory_space<vmem>>, vector<8x128xf32>
      tpu.vector_store %arg5[%c0_26, %c0_27], %28 {strides = array<i32>} : memref<8x128xf32, #tpu.memory_space<vmem>>, vector<8x128xf32>,
      %cst_28 = arith.constant 0.000000e+00 : f32
      %30 = vector.broadcast %cst_28 : f32 to vector<8x128xf32>
      %c0_29 = arith.constant 0 : index
      %c0_30 = arith.constant 0 : index
      %31 = vector.load %arg6[%c0_29, %c0_30] : memref<8x128xf32, #tpu.memory_space<vmem>>, vector<8x128xf32>
      tpu.vector_store %arg6[%c0_29, %c0_30], %30 {strides = array<i32>} : memref<8x128xf32, #tpu.memory_space<vmem>>, vector<8x128xf32>,
      %cst_31 = arith.constant 0.000000e+00 : f32
      %32 = vector.broadcast %cst_31 : f32 to vector<8x128xf32>
      %c0_32 = arith.constant 0 : index
      %c0_33 = arith.constant 0 : index
      %33 = vector.load %arg7[%c0_32, %c0_33] : memref<8x128xf32, #tpu.memory_space<vmem>>, vector<8x128xf32>
      tpu.vector_store %arg7[%c0_32, %c0_33], %32 {strides = array<i32>} : memref<8x128xf32, #tpu.memory_space<vmem>>, vector<8x128xf32>,
      %cst_34 = arith.constant 0.000000e+00 : f32
      %34 = vector.broadcast %cst_34 : f32 to vector<8x128xf32>
      %c0_35 = arith.constant 0 : index
      %c0_36 = arith.constant 0 : index
      %35 = vector.load %arg8[%c0_35, %c0_36] : memref<8x128xf32, #tpu.memory_space<vmem>>, vector<8x128xf32>
      tpu.vector_store %arg8[%c0_35, %c0_36], %34 {strides = array<i32>} : memref<8x128xf32, #tpu.memory_space<vmem>>, vector<8x128xf32>,
    } else {
    }
    %c0 = arith.constant 0 : index
    %c0_1 = arith.constant 0 : index
    %3 = vector.load %arg1[%c0, %c0_1] : memref<128x128xf32, #tpu.memory_space<vmem>>, vector<128x128xf32>
    %4 = vector.shape_cast %3 : vector<128x128xf32> to vector<16x8x128xf32>
    %c0_2 = arith.constant 0 : index
    %c0_3 = arith.constant 0 : index
    %5 = vector.load %arg5[%c0_2, %c0_3] : memref<8x128xf32, #tpu.memory_space<vmem>>, vector<8x128xf32>
    %cst = arith.constant dense<0.000000e+00> : vector<8x128xf32>
    %6 = vector.multi_reduction <add>, %4, %cst [0] : vector<16x8x128xf32> to vector<8x128xf32>
    %7 = arith.addf %5, %6 : vector<8x128xf32>
    %c0_4 = arith.constant 0 : index
    %c0_5 = arith.constant 0 : index
    %8 = vector.load %arg5[%c0_4, %c0_5] : memref<8x128xf32, #tpu.memory_space<vmem>>, vector<8x128xf32>
    tpu.vector_store %arg5[%c0_4, %c0_5], %7 {strides = array<i32>} : memref<8x128xf32, #tpu.memory_space<vmem>>, vector<8x128xf32>,
    %c0_6 = arith.constant 0 : index
    %c0_7 = arith.constant 0 : index
    %9 = vector.load %arg6[%c0_6, %c0_7] : memref<8x128xf32, #tpu.memory_space<vmem>>, vector<8x128xf32>
    %10 = arith.mulf %4, %4 : vector<16x8x128xf32>
    %cst_8 = arith.constant dense<0.000000e+00> : vector<8x128xf32>
    %11 = vector.multi_reduction <add>, %10, %cst_8 [0] : vector<16x8x128xf32> to vector<8x128xf32>
    %12 = arith.addf %9, %11 : vector<8x128xf32>
    %c0_9 = arith.constant 0 : index
    %c0_10 = arith.constant 0 : index
    %13 = vector.load %arg6[%c0_9, %c0_10] : memref<8x128xf32, #tpu.memory_space<vmem>>, vector<8x128xf32>
    tpu.vector_store %arg6[%c0_9, %c0_10], %12 {strides = array<i32>} : memref<8x128xf32, #tpu.memory_space<vmem>>, vector<8x128xf32>,
    %c0_11 = arith.constant 0 : index
    %c0_12 = arith.constant 0 : index
    %14 = vector.load %arg2[%c0_11, %c0_12] : memref<128x128xf32, #tpu.memory_space<vmem>>, vector<128x128xf32>
    %15 = vector.shape_cast %14 : vector<128x128xf32> to vector<16x8x128xf32>
    %c0_13 = arith.constant 0 : index
    %c0_14 = arith.constant 0 : index
    %16 = vector.load %arg7[%c0_13, %c0_14] : memref<8x128xf32, #tpu.memory_space<vmem>>, vector<8x128xf32>
    %cst_15 = arith.constant dense<0.000000e+00> : vector<8x128xf32>
    %17 = vector.multi_reduction <add>, %15, %cst_15 [0] : vector<16x8x128xf32> to vector<8x128xf32>
    %18 = arith.addf %16, %17 : vector<8x128xf32>
    %c0_16 = arith.constant 0 : index
    %c0_17 = arith.constant 0 : index
    %19 = vector.load %arg7[%c0_16, %c0_17] : memref<8x128xf32, #tpu.memory_space<vmem>>, vector<8x128xf32>
    tpu.vector_store %arg7[%c0_16, %c0_17], %18 {strides = array<i32>} : memref<8x128xf32, #tpu.memory_space<vmem>>, vector<8x128xf32>,
    %c0_18 = arith.constant 0 : index
    %c0_19 = arith.constant 0 : index
    %20 = vector.load %arg8[%c0_18, %c0_19] : memref<8x128xf32, #tpu.memory_space<vmem>>, vector<8x128xf32>
    %21 = arith.mulf %15, %15 : vector<16x8x128xf32>
    %cst_20 = arith.constant dense<0.000000e+00> : vector<8x128xf32>
    %22 = vector.multi_reduction <add>, %21, %cst_20 [0] : vector<16x8x128xf32> to vector<8x128xf32>
    %23 = arith.addf %20, %22 : vector<8x128xf32>
    %c0_21 = arith.constant 0 : index
    %c0_22 = arith.constant 0 : index
    %24 = vector.load %arg8[%c0_21, %c0_22] : memref<8x128xf32, #tpu.memory_space<vmem>>, vector<8x128xf32>
    tpu.vector_store %arg8[%c0_21, %c0_22], %23 {strides = array<i32>} : memref<8x128xf32, #tpu.memory_space<vmem>>, vector<8x128xf32>,
    %c0_i32_23 = arith.constant 0 : i32
    %25 = arith.cmpi eq, %arg0, %c0_i32_23 : i32
    %26 = arith.extui %25 : i1 to i32
    %c0_i32_24 = arith.constant 0 : i32
    %27 = arith.cmpi ne, %26, %c0_i32_24 : i32
    scf.if %27 {
      "tpu.region"() ({
        %94 = tpu.sem_alloc : memref<!tpu.dma_semaphore, #tpu.memory_space<semaphore_mem>>
        tpu.enqueue_dma source(%arg3 : memref<128x256xf32, #tpu.memory_space<any>>) target(%arg9 : memref<128x256xf32, #tpu.memory_space<vmem>>) target_semaphore(%94 : memref<!tpu.dma_semaphore, #tpu.memory_space<semaphore_mem>>)
        tpu.wait_dma2 semaphore(%94 : memref<!tpu.dma_semaphore, #tpu.memory_space<semaphore_mem>>) src(%arg3 : memref<128x256xf32, #tpu.memory_space<any>>) dst(%arg9 : memref<128x256xf32, #tpu.memory_space<vmem>>)
        tpu.yield
      }) : () -> ()
      %c0_25 = arith.constant 0 : index
      %c0_26 = arith.constant 0 : index
      %28 = vector.load %arg5[%c0_25, %c0_26] : memref<8x128xf32, #tpu.memory_space<vmem>>, vector<8x128xf32>
      %c0_27 = arith.constant 0 : index
      %c0_28 = arith.constant 0 : index
      %29 = vector.load %arg6[%c0_27, %c0_28] : memref<8x128xf32, #tpu.memory_space<vmem>>, vector<8x128xf32>
      %cst_29 = arith.constant dense<0.000000e+00> : vector<128xf32>
      %30 = vector.multi_reduction <add>, %28, %cst_29 [0] : vector<8x128xf32> to vector<128xf32>
      %31 = vector.shape_cast %30 : vector<128xf32> to vector<1x128xf32>
      %cst_30 = arith.constant dense<0.000000e+00> : vector<128xf32>
      %32 = vector.multi_reduction <add>, %29, %cst_30 [0] : vector<8x128xf32> to vector<128xf32>
      %33 = vector.shape_cast %32 : vector<128xf32> to vector<1x128xf32>
      %34 = vector.shape_cast %31 : vector<1x128xf32> to vector<1x1x128xf32>
      %cst_31 = arith.constant dense<0.000000e+00> : vector<1xf32>
      %35 = vector.multi_reduction <add>, %34, %cst_31 [1, 2] : vector<1x1x128xf32> to vector<1xf32>
      %36 = vector.shape_cast %35 : vector<1xf32> to vector<1x1x1xf32>
      %37 = vector.extract %36[0, 0, 0] : f32 from vector<1x1x1xf32>
      %cst_32 = arith.constant 6.10351563E-5 : f32
      %38 = arith.mulf %37, %cst_32 : f32
      %39 = vector.shape_cast %33 : vector<1x128xf32> to vector<1x1x128xf32>
      %cst_33 = arith.constant dense<0.000000e+00> : vector<1xf32>
      %40 = vector.multi_reduction <add>, %39, %cst_33 [1, 2] : vector<1x1x128xf32> to vector<1xf32>
      %41 = vector.shape_cast %40 : vector<1xf32> to vector<1x1x1xf32>
      %42 = vector.extract %41[0, 0, 0] : f32 from vector<1x1x1xf32>
      %cst_34 = arith.constant 6.10351563E-5 : f32
      %43 = arith.mulf %42, %cst_34 : f32
      %44 = arith.mulf %38, %38 : f32
      %45 = arith.subf %43, %44 : f32
      %cst_35 = arith.constant 0.000000e+00 : f32
      %46 = arith.maximumf %45, %cst_35 : f32
      %cst_36 = arith.constant 1.000000e-07 : f32
      %47 = arith.addf %46, %cst_36 : f32
      %48 = math.rsqrt %47 : f32
      %cst_37 = arith.constant 7.812500e-03 : f32
      %49 = vector.broadcast %cst_37 : f32 to vector<1x128xf32>
      %50 = arith.mulf %31, %49 : vector<1x128xf32>
      %51 = vector.broadcast %38 : f32 to vector<1x128xf32>
      %52 = arith.subf %50, %51 : vector<1x128xf32>
      %53 = vector.broadcast %48 : f32 to vector<1x128xf32>
      %54 = arith.mulf %52, %53 : vector<1x128xf32>
      %c0_38 = arith.constant 0 : index
      %c0_39 = arith.constant 0 : index
      %55 = vector.load %arg7[%c0_38, %c0_39] : memref<8x128xf32, #tpu.memory_space<vmem>>, vector<8x128xf32>
      %c0_40 = arith.constant 0 : index
      %c0_41 = arith.constant 0 : index
      %56 = vector.load %arg8[%c0_40, %c0_41] : memref<8x128xf32, #tpu.memory_space<vmem>>, vector<8x128xf32>
      %cst_42 = arith.constant dense<0.000000e+00> : vector<128xf32>
      %57 = vector.multi_reduction <add>, %55, %cst_42 [0] : vector<8x128xf32> to vector<128xf32>
      %58 = vector.shape_cast %57 : vector<128xf32> to vector<1x128xf32>
      %cst_43 = arith.constant dense<0.000000e+00> : vector<128xf32>
      %59 = vector.multi_reduction <add>, %56, %cst_43 [0] : vector<8x128xf32> to vector<128xf32>
      %60 = vector.shape_cast %59 : vector<128xf32> to vector<1x128xf32>
      %61 = vector.shape_cast %58 : vector<1x128xf32> to vector<1x1x128xf32>
      %cst_44 = arith.constant dense<0.000000e+00> : vector<1xf32>
      %62 = vector.multi_reduction <add>, %61, %cst_44 [1, 2] : vector<1x1x128xf32> to vector<1xf32>
      %63 = vector.shape_cast %62 : vector<1xf32> to vector<1x1x1xf32>
      %64 = vector.extract %63[0, 0, 0] : f32 from vector<1x1x1xf32>
      %cst_45 = arith.constant 6.10351563E-5 : f32
      %65 = arith.mulf %64, %cst_45 : f32
      %66 = vector.shape_cast %60 : vector<1x128xf32> to vector<1x1x128xf32>
      %cst_46 = arith.constant dense<0.000000e+00> : vector<1xf32>
      %67 = vector.multi_reduction <add>, %66, %cst_46 [1, 2] : vector<1x1x128xf32> to vector<1xf32>
      %68 = vector.shape_cast %67 : vector<1xf32> to vector<1x1x1xf32>
      %69 = vector.extract %68[0, 0, 0] : f32 from vector<1x1x1xf32>
      %cst_47 = arith.constant 6.10351563E-5 : f32
      %70 = arith.mulf %69, %cst_47 : f32
      %71 = arith.mulf %65, %65 : f32
      %72 = arith.subf %70, %71 : f32
      %cst_48 = arith.constant 0.000000e+00 : f32
      %73 = arith.maximumf %72, %cst_48 : f32
      %cst_49 = arith.constant 1.000000e-07 : f32
      %74 = arith.addf %73, %cst_49 : f32
      %75 = math.rsqrt %74 : f32
      %cst_50 = arith.constant 7.812500e-03 : f32
      %76 = vector.broadcast %cst_50 : f32 to vector<1x128xf32>
      %77 = arith.mulf %58, %76 : vector<1x128xf32>
      %78 = vector.broadcast %65 : f32 to vector<1x128xf32>
      %79 = arith.subf %77, %78 : vector<1x128xf32>
      %80 = vector.broadcast %75 : f32 to vector<1x128xf32>
      %81 = arith.mulf %79, %80 : vector<1x128xf32>
      %82 = tpu.concatenate %54, %81 in 0 : vector<1x128xf32>, vector<1x128xf32> -> vector<2x128xf32>
      %c0_51 = arith.constant 0 : index
      %c0_52 = arith.constant 0 : index
      %83 = vector.load %arg9[%c0_51, %c0_52] : memref<128x256xf32, #tpu.memory_space<vmem>>, vector<128x256xf32>
      %cst_53 = arith.constant dense<0.000000e+00> : vector<2x256xf32>
      %84 = tpu.matmul %82, %83, %cst_53 {dimension_numbers = #tpu.dot_dimension_numbers<[1], [0], [0], [1], [0, 0, 1, 1], [], []>} : vector<2x128xf32>, vector<128x256xf32>, vector<2x256xf32> -> vector<2x256xf32>
      %85 = arith.mulf %84, %84 : vector<2x256xf32>
      %cst_54 = arith.constant dense<0.000000e+00> : vector<2xf32>
      %86 = vector.multi_reduction <add>, %85, %cst_54 [1] : vector<2x256xf32> to vector<2xf32>
      %87 = vector.shape_cast %86 : vector<2xf32> to vector<2x1xf32>
      %cst_55 = arith.constant 1.000000e-24 : f32
      %88 = vector.broadcast %cst_55 : f32 to vector<2x1xf32>
      %89 = arith.maximumf %87, %88 : vector<2x1xf32>
      %90 = math.rsqrt %89 : vector<2x1xf32>
      %91 = vector.broadcast %90 : vector<2x1xf32> to vector<2x256xf32>
      %92 = arith.mulf %84, %91 : vector<2x256xf32>
      %c0_56 = arith.constant 0 : index
      %c0_57 = arith.constant 0 : index
      %93 = vector.load %arg4[%c0_56, %c0_57] : memref<2x256xf32, #tpu.memory_space<vmem>>, vector<2x256xf32>
      tpu.vector_store %arg4[%c0_56, %c0_57], %92 {strides = array<i32>} : memref<2x256xf32, #tpu.memory_space<vmem>>, vector<2x256xf32>,
    } else {
    }
    return
  }
  func.func @transform_0(%arg0: i32) -> (i32, i32) {
    %c0_i32 = arith.constant 0 : i32
    %c0_i32_0 = arith.constant 0 : i32
    return %arg0, %c0_i32 : i32, i32
  }
  func.func @transform_1(%arg0: i32) -> (i32, i32) {
    %c0_i32 = arith.constant 0 : i32
    %c0_i32_0 = arith.constant 0 : i32
    return %arg0, %c0_i32 : i32, i32
  }
  func.func @transform_3(%arg0: i32) -> (i32, i32) {
    %c0_i32 = arith.constant 0 : i32
    %c0_i32_0 = arith.constant 0 : i32
    %c0_i32_1 = arith.constant 0 : i32
    return %c0_i32, %c0_i32_0 : i32, i32
  }
}

</mosaic_0001>

<llo_original>
// kernel: tpu_custom_call.1
$region0: #{tpu_custom_call.1}
  #allocation0 [shape = 'u32[]', space=smem, size = 0x4, offset = 0x4, fixed_abs, tag = 'smem constant byte address 0x4 - core index']
  #allocation1 [shape = 'u32[144,128]{1,0:T(1,128)}', space=vmem, size = 0x12000, scoped, tag = 'internal scratch']
  #allocation2 [shape = 'f32[8,128]{1,0:T(8,128)}', space=vmem, size = 0x1000, scoped, tag = 'scratch operand']
  #allocation3 [shape = 'f32[8,128]{1,0:T(8,128)}', space=vmem, size = 0x1000, scoped, tag = 'scratch operand']
  #allocation4 [shape = 'f32[8,128]{1,0:T(8,128)}', space=vmem, size = 0x1000, scoped, tag = 'scratch operand']
  #allocation5 [shape = 'f32[8,128]{1,0:T(8,128)}', space=vmem, size = 0x1000, scoped, tag = 'scratch operand']
  #allocation6 [shape = 'f32[128,256]{1,0:T(8,128)}', space=vmem, size = 0x20000, scoped, tag = 'scratch operand']
  #allocation14 [shape = 's32[]', space=sflag, size = 0x4, offset = 0, fixed_abs, tag = 'sflag constant byte address 0x0 - dummy sync flag']
  #allocation15 [shape = 's32[]', space=sflag, size = 0x4, offset = 0, fixed_abs, tag = 'sflag constant byte address 0x0 - dummy sync flag']
  #allocation16 [shape = 'u32[]', space=smem, size = 0x4, offset = 0x44, fixed_abs, tag = 'smem constant byte address 0x44 - assertion arg 0']
  #allocation17 [shape = 'u32[]', space=smem, size = 0x4, offset = 0x48, fixed_abs, tag = 'smem constant byte address 0x48 - assertion arg 1']
  %s0 = inlined_call_operand.hbm [shape: f32[128,128], index: 0, kind: input, shape index: {}]
  %s1 = inlined_call_operand.hbm [shape: f32[128,128], index: 1, kind: input, shape index: {}]
  %s2 = inlined_call_operand.hbm [shape: f32[128,256], index: 2, kind: input, shape index: {}]
  %s3 = inlined_call_operand.hbm [shape: f32[2,256], index: 3, kind: output, shape index: {}]
  %s4 = sld [smem:[#allocation0]]
  $region39: #{tpu_custom_call.1} parent=0
    _
  %s6 = ssub.s32 1, %s4
  %s7 = scalar_select 0, %s6, %s4
  $region1: #{tpu_custom_call.1} parent=0
    #allocation7 [shape = 'u8[65536]{0}', space=vmem, size = 0x10000, scoped, tag = 'input window, operand 0, single buffered']
    #allocation8 [shape = 's32[1]{0}', space=sflag, size = 0x4, scoped, tag = 'scoped memory for tpu_custom_call.1']
    #allocation9 [shape = 's32[1]{0}', space=sflag, size = 0x4, scoped, tag = 'scoped memory for tpu_custom_call.1']
    #allocation10 [shape = 'u8[65536]{0}', space=vmem, size = 0x10000, scoped, tag = 'input window, operand 1, single buffered']
    #allocation11 [shape = 's32[1]{0}', space=sflag, size = 0x4, scoped, tag = 'scoped memory for tpu_custom_call.1']
    #allocation12 [shape = 'u8[2048]{0}', space=vmem, size = 0x800, scoped, tag = 'output window, operand 0, single buffered']
    %8 = vsyncpa [#allocation8], 0
    %9 = vsyncpa [#allocation11], 0
    %10 = vsyncpa [#allocation9], 0
    // Predicated region
    $region2: #{tpu_custom_call.1} parent=1 // pred_check
      _
    $region3: #{tpu_custom_call.1} parent=1 // pred_check_branch
      %12 = sbr.rel (0) target = $region5
    $region4: #{tpu_custom_call.1} parent=1 // pred_region
      %s14 = ssub.s32 2048, 2048
      %15 = vsyncadd [#allocation8], %s14
      %s16 = sshll.u32 [#allocation7], 4
      %s17 = int_to_ptr.vmem [resolvable:$true] %s16
      %22 = dma.hbm_to_vmem [thread:$0]  %s0, 2048, %s17, [#allocation8], 128, 128, 8
    $region5: #{tpu_custom_call.1} parent=1 // pred_fallthru
      _
    // Predicated region
    $region6: #{tpu_custom_call.1} parent=1 // pred_check
      _
    $region7: #{tpu_custom_call.1} parent=1 // pred_check_branch
      %24 = sbr.rel (0) target = $region9
    $region8: #{tpu_custom_call.1} parent=1 // pred_region
      %s26 = ssub.s32 2048, 2048
      %27 = vsyncadd [#allocation11], %s26
      %s28 = sshll.u32 [#allocation10], 4
      %s29 = int_to_ptr.vmem [resolvable:$true] %s28
      %34 = dma.hbm_to_vmem [thread:$0]  %s1, 2048, %s29, [#allocation11], 128, 128, 8
    $region9: #{tpu_custom_call.1} parent=1 // pred_fallthru
      _
    // Predicated region
    $region10: #{tpu_custom_call.1} parent=1 // pred_check
      _
    $region11: #{tpu_custom_call.1} parent=1 // pred_check_branch
      %36 = sbr.rel (0) target = $region13
    $region12: #{tpu_custom_call.1} parent=1 // pred_region
      %37 = dma.done [#allocation8], 2048
    $region13: #{tpu_custom_call.1} parent=1 // pred_fallthru
      _
    // Predicated region
    $region14: #{tpu_custom_call.1} parent=1 // pred_check
      _
    $region15: #{tpu_custom_call.1} parent=1 // pred_check_branch
      %39 = sbr.rel (0) target = $region17
    $region16: #{tpu_custom_call.1} parent=1 // pred_region
      %40 = dma.done [#allocation11], 2048
    $region17: #{tpu_custom_call.1} parent=1 // pred_fallthru
      _
    %p41 = scmp.eq.s32.totalorder 0, 0
    // Predicated region
    $region18: #{tpu_custom_call.1} parent=1 // pred_check
      %p42 = pneg %p41
    $region19: #{tpu_custom_call.1} parent=1 // pred_check_branch
      %44 = sbr.rel (%p42) target = $region21
    $region20: #{tpu_custom_call.1} parent=1 // pred_region
      %45 = vst [vmem:[#allocation2] sm:$0xff] 0.0
      %46 = vst [vmem:[#allocation3] sm:$0xff] 0.0
      %47 = vst [vmem:[#allocation4] sm:$0xff] 0.0
      %48 = vst [vmem:[#allocation5] sm:$0xff] 0.0
    $region21: #{tpu_custom_call.1} parent=1 // pred_fallthru
      _
    %v49 = vld [vmem:[#allocation7] sm:$0xff]
    %v50 = vld [vmem:[#allocation7 + $0x8] sm:$0xff]
    %v51 = vld [vmem:[#allocation7 + $0x10] sm:$0xff]
    %v52 = vld [vmem:[#allocation7 + $0x18] sm:$0xff]
    %v53 = vld [vmem:[#allocation7 + $0x20] sm:$0xff]
    %v54 = vld [vmem:[#allocation7 + $0x28] sm:$0xff]
    %v55 = vld [vmem:[#allocation7 + $0x30] sm:$0xff]
    %v56 = vld [vmem:[#allocation7 + $0x38] sm:$0xff]
    %v57 = vld [vmem:[#allocation7 + $0x40] sm:$0xff]
    %v58 = vld [vmem:[#allocation7 + $0x48] sm:$0xff]
    %v59 = vld [vmem:[#allocation7 + $0x50] sm:$0xff]
    %v60 = vld [vmem:[#allocation7 + $0x58] sm:$0xff]
    %v61 = vld [vmem:[#allocation7 + $0x60] sm:$0xff]
    %v62 = vld [vmem:[#allocation7 + $0x68] sm:$0xff]
    %v63 = vld [vmem:[#allocation7 + $0x70] sm:$0xff]
    %v64 = vld [vmem:[#allocation7 + $0x78] sm:$0xff]
    %v65 = vld [vmem:[#allocation2] sm:$0xff]
    %v66 = vadd.f32 %v49, %v50
    %v67 = vadd.f32 %v66, %v51
    %v68 = vadd.f32 %v67, %v52
    %v69 = vadd.f32 %v68, %v53
    %v70 = vadd.f32 %v69, %v54
    %v71 = vadd.f32 %v70, %v55
    %v72 = vadd.f32 %v71, %v56
    %v73 = vadd.f32 %v72, %v57
    %v74 = vadd.f32 %v73, %v58
    %v75 = vadd.f32 %v74, %v59
    %v76 = vadd.f32 %v75, %v60
    %v77 = vadd.f32 %v76, %v61
    %v78 = vadd.f32 %v77, %v62
    %v79 = vadd.f32 %v78, %v63
    %v80 = vadd.f32 %v79, %v64
    %v81 = vadd.f32 %v65, %v80
    %82 = vst [vmem:[#allocation2] sm:$0xff] %v81
    %v83 = vld [vmem:[#allocation3] sm:$0xff]
    %v84 = vmul.f32 %v49, %v49
    %v85 = vmul.f32 %v50, %v50
    %v86 = vmul.f32 %v51, %v51
    %v87 = vmul.f32 %v52, %v52
    %v88 = vmul.f32 %v53, %v53
    %v89 = vmul.f32 %v54, %v54
    %v90 = vmul.f32 %v55, %v55
    %v91 = vmul.f32 %v56, %v56
    %v92 = vmul.f32 %v57, %v57
    %v93 = vmul.f32 %v58, %v58
    %v94 = vmul.f32 %v59, %v59
    %v95 = vmul.f32 %v60, %v60
    %v96 = vmul.f32 %v61, %v61
    %v97 = vmul.f32 %v62, %v62
    %v98 = vmul.f32 %v63, %v63
    %v99 = vmul.f32 %v64, %v64
    %v100 = vadd.f32 %v84, %v85
    %v101 = vadd.f32 %v100, %v86
    %v102 = vadd.f32 %v101, %v87
    %v103 = vadd.f32 %v102, %v88
    %v104 = vadd.f32 %v103, %v89
    %v105 = vadd.f32 %v104, %v90
    %v106 = vadd.f32 %v105, %v91
    %v107 = vadd.f32 %v106, %v92
    %v108 = vadd.f32 %v107, %v93
    %v109 = vadd.f32 %v108, %v94
    %v110 = vadd.f32 %v109, %v95
    %v111 = vadd.f32 %v110, %v96
    %v112 = vadd.f32 %v111, %v97
    %v113 = vadd.f32 %v112, %v98
    %v114 = vadd.f32 %v113, %v99
    %v115 = vadd.f32 %v83, %v114
    %116 = vst [vmem:[#allocation3] sm:$0xff] %v115
    %v117 = vld [vmem:[#allocation10] sm:$0xff]
    %v118 = vld [vmem:[#allocation10 + $0x8] sm:$0xff]
    %v119 = vld [vmem:[#allocation10 + $0x10] sm:$0xff]
    %v120 = vld [vmem:[#allocation10 + $0x18] sm:$0xff]
    %v121 = vld [vmem:[#allocation10 + $0x20] sm:$0xff]
    %v122 = vld [vmem:[#allocation10 + $0x28] sm:$0xff]
    %v123 = vld [vmem:[#allocation10 + $0x30] sm:$0xff]
    %v124 = vld [vmem:[#allocation10 + $0x38] sm:$0xff]
    %v125 = vld [vmem:[#allocation10 + $0x40] sm:$0xff]
    %v126 = vld [vmem:[#allocation10 + $0x48] sm:$0xff]
    %v127 = vld [vmem:[#allocation10 + $0x50] sm:$0xff]
    %v128 = vld [vmem:[#allocation10 + $0x58] sm:$0xff]
    %v129 = vld [vmem:[#allocation10 + $0x60] sm:$0xff]
    %v130 = vld [vmem:[#allocation10 + $0x68] sm:$0xff]
    %v131 = vld [vmem:[#allocation10 + $0x70] sm:$0xff]
    %v132 = vld [vmem:[#allocation10 + $0x78] sm:$0xff]
    %v133 = vld [vmem:[#allocation4] sm:$0xff]
    %v134 = vadd.f32 %v117, %v118
    %v135 = vadd.f32 %v134, %v119
    %v136 = vadd.f32 %v135, %v120
    %v137 = vadd.f32 %v136, %v121
    %v138 = vadd.f32 %v137, %v122
    %v139 = vadd.f32 %v138, %v123
    %v140 = vadd.f32 %v139, %v124
    %v141 = vadd.f32 %v140, %v125
    %v142 = vadd.f32 %v141, %v126
    %v143 = vadd.f32 %v142, %v127
    %v144 = vadd.f32 %v143, %v128
    %v145 = vadd.f32 %v144, %v129
    %v146 = vadd.f32 %v145, %v130
    %v147 = vadd.f32 %v146, %v131
    %v148 = vadd.f32 %v147, %v132
    %v149 = vadd.f32 %v133, %v148
    %150 = vst [vmem:[#allocation4] sm:$0xff] %v149
    %v151 = vld [vmem:[#allocation5] sm:$0xff]
    %v152 = vmul.f32 %v117, %v117
    %v153 = vmul.f32 %v118, %v118
    %v154 = vmul.f32 %v119, %v119
    %v155 = vmul.f32 %v120, %v120
    %v156 = vmul.f32 %v121, %v121
    %v157 = vmul.f32 %v122, %v122
    %v158 = vmul.f32 %v123, %v123
    %v159 = vmul.f32 %v124, %v124
    %v160 = vmul.f32 %v125, %v125
    %v161 = vmul.f32 %v126, %v126
    %v162 = vmul.f32 %v127, %v127
    %v163 = vmul.f32 %v128, %v128
    %v164 = vmul.f32 %v129, %v129
    %v165 = vmul.f32 %v130, %v130
    %v166 = vmul.f32 %v131, %v131
    %v167 = vmul.f32 %v132, %v132
    %v168 = vadd.f32 %v152, %v153
    %v169 = vadd.f32 %v168, %v154
    %v170 = vadd.f32 %v169, %v155
    %v171 = vadd.f32 %v170, %v156
    %v172 = vadd.f32 %v171, %v157
    %v173 = vadd.f32 %v172, %v158
    %v174 = vadd.f32 %v173, %v159
    %v175 = vadd.f32 %v174, %v160
    %v176 = vadd.f32 %v175, %v161
    %v177 = vadd.f32 %v176, %v162
    %v178 = vadd.f32 %v177, %v163
    %v179 = vadd.f32 %v178, %v164
    %v180 = vadd.f32 %v179, %v165
    %v181 = vadd.f32 %v180, %v166
    %v182 = vadd.f32 %v181, %v167
    %v183 = vadd.f32 %v151, %v182
    %184 = vst [vmem:[#allocation5] sm:$0xff] %v183
    // Predicated region
    $region22: #{tpu_custom_call.1} parent=1 // pred_check
      %p185 = pneg %p41
    $region23: #{tpu_custom_call.1} parent=1 // pred_check_branch
      %187 = sbr.rel (%p185) target = $region25
    $region24: #{tpu_custom_call.1} parent=1 // pred_region
      $region26: #{tpu_custom_call.1} parent=24
        #allocation13 [shape = 's32[1]{0}', space=sflag, size = 0x4, scoped, tag = 'scoped memory for tpu_custom_call.1']
        // Predicated region
        $region27: #{tpu_custom_call.1} parent=26 // pred_check
          _
        $region28: #{tpu_custom_call.1} parent=26 // pred_check_branch
          %189 = sbr.rel target = $region30
        $region29: #{tpu_custom_call.1} parent=26 // pred_region
          %190 = sst [smem:[#allocation16]] [#allocation15]
          %191 = sst [smem:[#allocation17]] [#allocation14]
        $region30: #{tpu_custom_call.1} parent=26 // pred_fallthru
          _
        %193 = shalt.err (0)
        %s195 = sshll.u32 [#allocation6], 4
        %s196 = int_to_ptr.vmem [resolvable:$true] %s195
        %198 = dma.hbm_to_vmem [thread:$0]  %s2, 4096, %s196, [#allocation13]
        %s199 = smul.u32 8, 16
        %s200 = smul.u32 %s199, 2
        %s201 = sshll.u32 %s200, 4
        %202 = dma.done [#allocation13], %s201
      %v203 = vld [vmem:[#allocation2] sm:$0xff]
      %v204 = vld [vmem:[#allocation3] sm:$0xff]
      %v205 = vrot.slane %v203, 4
      %v206 = vadd.f32 %v203, %v205
      %v207 = vrot.slane %v206, 2
      %v208 = vadd.f32 %v206, %v207
      %v209 = vrot.slane %v208, 1
      %v210 = vadd.f32 %v208, %v209
      %v211 = vrot.slane %v204, 4
      %v212 = vadd.f32 %v204, %v211
      %v213 = vrot.slane %v212, 2
      %v214 = vadd.f32 %v212, %v213
      %v215 = vrot.slane %v214, 1
      %v216 = vadd.f32 %v214, %v215
      %vm217 = vcmask 1040384
      %v218 = vsel %vm217, %v210, 0.0
      %219 = vadd.xlane.f32.xlu0 %v218
      %v220 = vpop.xlane.xlu0 %219
      %v221 = vrot.slane %v220, 4
      %v222 = vadd.f32 %v220, %v221
      %v223 = vrot.slane %v222, 2
      %v224 = vadd.f32 %v222, %v223
      %v225 = vrot.slane %v224, 1
      %v226 = vadd.f32 %v224, %v225
      %s227 = vtos %v226
      %s228 = smul.f32 %s227, 6.1035156e-05
      %v229 = vsel %vm217, %v216, 0.0
      %230 = vadd.xlane.f32.xlu0 %v229
      %v231 = vpop.xlane.xlu0 %230
      %v232 = vrot.slane %v231, 4
      %v233 = vadd.f32 %v231, %v232
      %v234 = vrot.slane %v233, 2
      %v235 = vadd.f32 %v233, %v234
      %v236 = vrot.slane %v235, 1
      %v237 = vadd.f32 %v235, %v236
      %s238 = vtos %v237
      %s239 = smul.f32 %s238, 6.1035156e-05
      %s240 = smul.f32 %s228, %s228
      %s241 = ssub.f32 %s239, %s240
      %s242 = smax.f32 %s241, 0.0
      %s243 = sadd.f32 %s242, 1e-07
      %v244 = vstv %s243
      %v245 = vrsqrt.pop %v244
      %s246 = vtos %v245
      %v247 = vmul.f32 %v210, 0.0078125
      %v248 = vstv %s228
      %v249 = vsub.f32 %v247, %v248
      %v250 = vstv %s246
      %v251 = vmul.f32 %v249, %v250
      %v252 = vld [vmem:[#allocation4] sm:$0xff]
      %v253 = vld [vmem:[#allocation5] sm:$0xff]
      %v254 = vrot.slane %v252, 4
      %v255 = vadd.f32 %v252, %v254
      %v256 = vrot.slane %v255, 2
      %v257 = vadd.f32 %v255, %v256
      %v258 = vrot.slane %v257, 1
      %v259 = vadd.f32 %v257, %v258
      %v260 = vrot.slane %v253, 4
      %v261 = vadd.f32 %v253, %v260
      %v262 = vrot.slane %v261, 2
      %v263 = vadd.f32 %v261, %v262
      %v264 = vrot.slane %v263, 1
      %v265 = vadd.f32 %v263, %v264
      %v266 = vsel %vm217, %v259, 0.0
      %267 = vadd.xlane.f32.xlu0 %v266
      %v268 = vpop.xlane.xlu0 %267
      %v269 = vrot.slane %v268, 4
      %v270 = vadd.f32 %v268, %v269
      %v271 = vrot.slane %v270, 2
      %v272 = vadd.f32 %v270, %v271
      %v273 = vrot.slane %v272, 1
      %v274 = vadd.f32 %v272, %v273
      %s275 = vtos %v274
      %s276 = smul.f32 %s275, 6.1035156e-05
      %v277 = vsel %vm217, %v265, 0.0
      %278 = vadd.xlane.f32.xlu0 %v277
      %v279 = vpop.xlane.xlu0 %278
      %v280 = vrot.slane %v279, 4
      %v281 = vadd.f32 %v279, %v280
      %v282 = vrot.slane %v281, 2
      %v283 = vadd.f32 %v281, %v282
      %v284 = vrot.slane %v283, 1
      %v285 = vadd.f32 %v283, %v284
      %s286 = vtos %v285
      %s287 = smul.f32 %s286, 6.1035156e-05
      %s288 = smul.f32 %s276, %s276
      %s289 = ssub.f32 %s287, %s288
      %s290 = smax.f32 %s289, 0.0
      %s291 = sadd.f32 %s290, 1e-07
      %v292 = vstv %s291
      %v293 = vrsqrt.pop %v292
      %s294 = vtos %v293
      %v295 = vmul.f32 %v259, 0.0078125
      %v296 = vstv %s276
      %v297 = vsub.f32 %v295, %v296
      %v298 = vstv %s294
      %v299 = vmul.f32 %v297, %v298
      %v300 = vsel %vm217, %v251, %v299
      %v301 = vld [vmem:[#allocation6] sm:$0xff]
      %v302 = vld [vmem:[#allocation6 + $0x8] sm:$0xff]
      %v303 = vld [vmem:[#allocation6 + $0x10] sm:$0xff]
      %v304 = vld [vmem:[#allocation6 + $0x18] sm:$0xff]
      %v305 = vld [vmem:[#allocation6 + $0x20] sm:$0xff]
      %v306 = vld [vmem:[#allocation6 + $0x28] sm:$0xff]
      %v307 = vld [vmem:[#allocation6 + $0x30] sm:$0xff]
      %v308 = vld [vmem:[#allocation6 + $0x38] sm:$0xff]
      %v309 = vld [vmem:[#allocation6 + $0x40] sm:$0xff]
      %v310 = vld [vmem:[#allocation6 + $0x48] sm:$0xff]
      %v311 = vld [vmem:[#allocation6 + $0x50] sm:$0xff]
      %v312 = vld [vmem:[#allocation6 + $0x58] sm:$0xff]
      %v313 = vld [vmem:[#allocation6 + $0x60] sm:$0xff]
      %v314 = vld [vmem:[#allocation6 + $0x68] sm:$0xff]
      %v315 = vld [vmem:[#allocation6 + $0x70] sm:$0xff]
      %v316 = vld [vmem:[#allocation6 + $0x78] sm:$0xff]
      %v317 = vld [vmem:[#allocation6 + $0x80] sm:$0xff]
      %v318 = vld [vmem:[#allocation6 + $0x88] sm:$0xff]
      %v319 = vld [vmem:[#allocation6 + $0x90] sm:$0xff]
      %v320 = vld [vmem:[#allocation6 + $0x98] sm:$0xff]
      %v321 = vld [vmem:[#allocation6 + $0xa0] sm:$0xff]
      %v322 = vld [vmem:[#allocation6 + $0xa8] sm:$0xff]
      %v323 = vld [vmem:[#allocation6 + $0xb0] sm:$0xff]
      %v324 = vld [vmem:[#allocation6 + $0xb8] sm:$0xff]
      %v325 = vld [vmem:[#allocation6 + $0xc0] sm:$0xff]
      %v326 = vld [vmem:[#allocation6 + $0xc8] sm:$0xff]
      %v327 = vld [vmem:[#allocation6 + $0xd0] sm:$0xff]
      %v328 = vld [vmem:[#allocation6 + $0xd8] sm:$0xff]
      %v329 = vld [vmem:[#allocation6 + $0xe0] sm:$0xff]
      %v330 = vld [vmem:[#allocation6 + $0xe8] sm:$0xff]
      %v331 = vld [vmem:[#allocation6 + $0xf0] sm:$0xff]
      %v332 = vld [vmem:[#allocation6 + $0xf8] sm:$0xff]
      %333 = vmatprep.subr.mxu0 %v302
      %334 = vmatpush1.msra.mxu0 %v301
      %335 = vmatprep.subr.mxu0 %v304
      %336 = vmatpush1.msra.mxu0 %v303
      %337 = vmatprep.subr.mxu0 %v306
      %338 = vmatpush1.msra.mxu0 %v305
      %339 = vmatprep.subr.mxu0 %v308
      %340 = vmatpush1.msra.mxu0 %v307
      %341 = vmatprep.subr.mxu0 %v310
      %342 = vmatpush1.msra.mxu0 %v309
      %343 = vmatprep.subr.mxu0 %v312
      %344 = vmatpush1.msra.mxu0 %v311
      %345 = vmatprep.subr.mxu0 %v314
      %346 = vmatpush1.msra.mxu0 %v313
      %347 = vmatprep.subr.mxu0 %v316
      %348 = vmatpush1.msra.mxu0 %v315
      %349 = vmatprep.subr.mxu0 %v318
      %350 = vmatpush1.msra.mxu0 %v317
      %351 = vmatprep.subr.mxu0 %v320
      %352 = vmatpush1.msra.mxu0 %v319
      %353 = vmatprep.subr.mxu0 %v322
      %354 = vmatpush1.msra.mxu0 %v321
      %355 = vmatprep.subr.mxu0 %v324
      %356 = vmatpush1.msra.mxu0 %v323
      %357 = vmatprep.subr.mxu0 %v326
      %358 = vmatpush1.msra.mxu0 %v325
      %359 = vmatprep.subr.mxu0 %v328
      %360 = vmatpush1.msra.mxu0 %v327
      %361 = vmatprep.subr.mxu0 %v330
      %362 = vmatpush1.msra.mxu0 %v329
      %363 = vmatprep.subr.mxu0 %v332
      %364 = vmatpush1.msra.mxu0 %v331
      %365 = vmatprep.subr.mxu0 0.0
      %366 = vmatpush1.msra.mxu0 0.0
      %367 = vmatprep.subr.mxu0 0.0
      %368 = vmatpush1.msra.mxu0 0.0
      %369 = vmatprep.subr.mxu0 0.0
      %370 = vmatpush1.msra.mxu0 0.0
      %371 = vmatprep.subr.mxu0 0.0
      %372 = vmatpush1.msra.mxu0 0.0
      %373 = vmatprep.subr.mxu0 0.0
      %374 = vmatpush1.msra.mxu0 0.0
      %375 = vmatprep.subr.mxu0 0.0
      %376 = vmatpush1.msra.mxu0 0.0
      %377 = vmatprep.subr.mxu0 0.0
      %378 = vmatpush1.msra.mxu0 0.0
      %379 = vmatprep.subr.mxu0 0.0
      %380 = vmatpush1.msra.mxu0 0.0
      %381 = vmatprep.subr.mxu0 0.0
      %382 = vmatpush1.msra.mxu0 0.0
      %383 = vmatprep.subr.mxu0 0.0
      %384 = vmatpush1.msra.mxu0 0.0
      %385 = vmatprep.subr.mxu0 0.0
      %386 = vmatpush1.msra.mxu0 0.0
      %387 = vmatprep.subr.mxu0 0.0
      %388 = vmatpush1.msra.mxu0 0.0
      %389 = vmatprep.subr.mxu0 0.0
      %390 = vmatpush1.msra.mxu0 0.0
      %391 = vmatprep.subr.mxu0 0.0
      %392 = vmatpush1.msra.mxu0 0.0
      %393 = vmatprep.subr.mxu0 0.0
      %394 = vmatpush1.msra.mxu0 0.0
      %395 = vmatprep.subr.mxu0 0.0
      %396 = vmatpush1.msra.mxu0 0.0
      %397 = vmatprep.mubr.f32.mxu0 0.0
      %398 = vmatmul.mubr.f32.gmra.mrb[0].mxu0 %v300
      %v399 = vpop.f32.mrb[0].mxu0
      %v400 = vadd.f32 0.0, %v399
      %v401 = vpop.f32.mrb[0].mxu0
      %v402 = vadd.f32 0.0, %v401
      %403 = vdwg.mxu0
      %v404 = vmul.f32 %v400, %v400
      %v405 = vmul.f32 %v402, %v402
      %vm406 = vcmask 1041408
      %v407 = vsel %vm406, %v404, 0.0
      %v408 = vsel %vm406, %v405, 0.0
      %v409 = vadd.f32 %v407, %v408
      %410 = vadd.xlane.f32.xlu0 %v409
      %v411 = vpop.xlane.xlu0 %410
      %v412 = vmax.f32 %v411, 1e-24
      %v413 = vrsqrt.pop %v412
      %v414 = vmul.f32 %v400, %v413
      %v415 = vmul.f32 %v402, %v413
      %v418 = vcombine.low %v414, %v415
      %v420 = vunpack.c.l.s4 1983009808
      %v421 = vunpack.c.0.s8 %v420
      %v422 = vlaneseq
      %v423 = vshrl.u32 %v422, 7
      %v424 = vsub.s32 %v421, %v423
      %v425 = vrot.slane %v418, %v424
      %427 = vst [vmem:[#allocation12] sm:$0xf] %v425
    $region25: #{tpu_custom_call.1} parent=1 // pred_fallthru
      _
    // Predicated region
    $region31: #{tpu_custom_call.1} parent=1 // pred_check
      _
    $region32: #{tpu_custom_call.1} parent=1 // pred_check_branch
      %429 = sbr.rel (0) target = $region34
    $region33: #{tpu_custom_call.1} parent=1 // pred_region
      %s431 = ssub.s32 64, 64
      %432 = vsyncadd [#allocation9], %s431
      %s434 = sshll.u32 [#allocation12], 4
      %s435 = int_to_ptr.vmem [resolvable:$true] %s434
      %437 = dma.vmem_to_hbm [thread:$0]  %s435, 64, %s3, [#allocation9]
    $region34: #{tpu_custom_call.1} parent=1 // pred_fallthru
      _
    // Predicated region
    $region35: #{tpu_custom_call.1} parent=1 // pred_check
      _
    $region36: #{tpu_custom_call.1} parent=1 // pred_check_branch
      %439 = sbr.rel (0) target = $region38
    $region37: #{tpu_custom_call.1} parent=1 // pred_region
      %440 = dma.done [#allocation9], 64
    $region38: #{tpu_custom_call.1} parent=1 // pred_fallthru
      _
    %441 = vsyncpa [#allocation8], 1
    %442 = vsyncpa [#allocation11], 1
    %443 = vsyncpa [#allocation9], 1

</llo_original>
